<compile_context>
chip_gen: v7x
topology: tpu7x:2x2x1
jax: 0.10.0
libtpu: 0.0.40
codegen_flags: <defaults>
</compile_context>

<pallas_src>
from functools import partial

import jax
import jax.numpy as jnp
from jax.experimental import pallas as pl
from jax.experimental.pallas import tpu as pltpu


IN_FEATURES = 16 * 16          # 256
HIDDEN = 100
HIDDEN_PAD = 128               # padded K dim of second matmul
OUT_PAD = 128                  # padded class/lane dim
SMALL_BATCH_THRESHOLD = 512    # grid-less fast path below this


# ---------------------------------------------------------------------------
# Fused kernel: fc1 -> relu -> fc2 -> masked softmax (all lane-dims = 128)
# ---------------------------------------------------------------------------
def testnet_kernel(x_ref, w1_ref, b1_ref, w2_ref, b2_ref, o_ref, *, num_classes):
    # x_ref : (TB, 256)        flattened input tile
    # w1_ref: (256, 128)       l1 weight, (in, out), zero-padded 100 -> 128
    # b1_ref: (1, 128)         zero-padded
    # w2_ref: (128, 128)       l2 weight, (in, out), zero-padded rows/cols
    # b2_ref: (1, 128)         zero-padded
    # o_ref : (TB, 128)        softmax probs (cols >= num_classes are 0)
    h = jnp.dot(x_ref[...], w1_ref[...], preferred_element_type=jnp.float32)
    h = jnp.maximum(h + b1_ref[...], 0.0)                       # ReLU
    # padded hidden cols: relu(x @ 0 + 0) = 0, and w2 padded rows are 0 -> exact

    logits = jnp.dot(h, w2_ref[...], preferred_element_type=jnp.float32)
    logits = logits + b2_ref[...]

    # mask padded class lanes so they contribute exp(~-inf) = 0 to the softmax
    lane = jax.lax.broadcasted_iota(jnp.int32, logits.shape, dimension=1)
    logits = jnp.where(lane < num_classes, logits, -1e30)

    # numerically-stable softmax along dim=1 (exact divide for parity)
    m = jnp.max(logits, axis=-1, keepdims=True)
    e = jnp.exp(logits - m)
    s = jnp.sum(e, axis=-1, keepdims=True)
    o_ref[...] = e / s


# ---------------------------------------------------------------------------
# Parameter prep: PyTorch (out, in) weights -> transposed + lane-padded
# ---------------------------------------------------------------------------
def prepare_params(w1_pt, b1_pt, w2_pt, b2_pt):
    # w1_pt: (100, 256), b1_pt: (100,), w2_pt: (NC, 100), b2_pt: (NC,)
    hidden, in_feat = w1_pt.shape
    nc = w2_pt.shape[0]
    w1 = jnp.zeros((in_feat, HIDDEN_PAD), jnp.float32).at[:, :hidden].set(w1_pt.T)
    b1 = jnp.zeros((1, HIDDEN_PAD), jnp.float32).at[:, :hidden].set(b1_pt)
    w2 = jnp.zeros((HIDDEN_PAD, OUT_PAD), jnp.float32).at[:hidden, :nc].set(w2_pt.T)
    b2 = jnp.zeros((1, OUT_PAD), jnp.float32).at[:, :nc].set(b2_pt)
    return {"w1": w1, "b1": b1, "w2": w2, "b2": b2}


# ---------------------------------------------------------------------------
# Wrapper
# ---------------------------------------------------------------------------
@partial(jax.jit, static_argnames=("num_classes", "tile_b"))
def testnet_forward(params, x, *, num_classes=10, tile_b=1024):
    B = x.shape[0]
    xf = x.reshape(B, -1).astype(jnp.float32)          # nn.Flatten()
    in_feat = xf.shape[1]
    w1, b1, w2, b2 = params["w1"], params["b1"], params["w2"], params["b2"]
    kernel = partial(testnet_kernel, num_classes=num_classes)

    if B <= SMALL_BATCH_THRESHOLD:
        # latency regime: single block, zero grid overhead
        out = pl.pallas_call(
            kernel,
            out_shape=jax.ShapeDtypeStruct((B, OUT_PAD), jnp.float32),
            in_specs=[pl.BlockSpec(memory_space=pltpu.MemorySpace.VMEM)] * 5,
            out_specs=pl.BlockSpec(memory_space=pltpu.MemorySpace.VMEM),
        )(xf, w1, b1, w2, b2)
        return out[:, :num_classes]

    # throughput regime: batch-tiled grid, weights resident across iterations
    n_tiles = pl.cdiv(B, tile_b)
    b_pad = n_tiles * tile_b
    if b_pad != B:
        xf = jnp.pad(xf, ((0, b_pad - B), (0, 0)))
    out = pl.pallas_call(
        kernel,
        out_shape=jax.ShapeDtypeStruct((b_pad, OUT_PAD), jnp.float32),
        grid=(n_tiles,),
        in_specs=[
            pl.BlockSpec((tile_b, in_feat), lambda i: (i, 0)),
            pl.BlockSpec(w1.shape, lambda i: (0, 0)),
            pl.BlockSpec(b1.shape, lambda i: (0, 0)),
            pl.BlockSpec(w2.shape, lambda i: (0, 0)),
            pl.BlockSpec(b2.shape, lambda i: (0, 0)),
        ],
        out_specs=pl.BlockSpec((tile_b, OUT_PAD), lambda i: (i, 0)),
        compiler_params=pltpu.CompilerParams(
            dimension_semantics=("parallel",)),
    )(xf, w1, b1, w2, b2)
    return out[:B, :num_classes]


# Pure-JAX reference (correctness check only), on the original PyTorch layout
def reference_forward(w1_pt, b1_pt, w2_pt, b2_pt, x):
    xf = x.reshape(x.shape[0], -1)
    h = jnp.maximum(xf @ w1_pt.T + b1_pt, 0.0)
    logits = h @ w2_pt.T + b2_pt
    return jax.nn.softmax(logits, axis=1)


if __name__ == "__main__":
    key = jax.random.PRNGKey(0)
    ks = jax.random.split(key, 6)
    num_classes = 10

    # PyTorch-layout parameters: (out, in) weights, 1-D biases
    w1_pt = jax.random.normal(ks[0], (HIDDEN, IN_FEATURES), jnp.float32) * 0.05
    b1_pt = jax.random.normal(ks[1], (HIDDEN,), jnp.float32) * 0.1
    w2_pt = jax.random.normal(ks[2], (num_classes, HIDDEN), jnp.float32) * 0.1
    b2_pt = jax.random.normal(ks[3], (num_classes,), jnp.float32) * 0.1
    params = prepare_params(w1_pt, b1_pt, w2_pt, b2_pt)

    # --- small batch: grid-less fast path --------------------------------
    x_small = jax.random.normal(ks[4], (2, 1, 16, 16), jnp.float32)
    out_s = jax.block_until_ready(
        testnet_forward(params, x_small, num_classes=num_classes))
    ref_s = reference_forward(w1_pt, b1_pt, w2_pt, b2_pt, x_small)
    assert out_s.shape == (2, num_classes) and out_s.dtype == jnp.float32
    assert jnp.allclose(jnp.sum(out_s, axis=1), 1.0, atol=1e-5)
    assert jnp.allclose(out_s, ref_s, atol=1e-5, rtol=1e-4)

    # --- larger, non-multiple batch: tiled grid path (exercises padding) --
    Bl = 1300
    x_large = jax.random.normal(ks[5], (Bl, 1, 16, 16), jnp.float32)
    out_l = jax.block_until_ready(
        testnet_forward(params, x_large, num_classes=num_classes, tile_b=512))
    ref_l = reference_forward(w1_pt, b1_pt, w2_pt, b2_pt, x_large)
    assert out_l.shape == (Bl, num_classes) and out_l.dtype == jnp.float32
    assert jnp.allclose(jnp.sum(out_l, axis=1), 1.0, atol=1e-5)
    assert jnp.allclose(out_l, ref_l, atol=1e-5, rtol=1e-4)

    print("KERNEL_OK")
</pallas_src>

<mosaic_0001>
module attributes {stable_mosaic.version = 11 : i64} {
  func.func @testnet_kernel(%arg0: memref<2x256xf32, #tpu.memory_space<vmem>>, %arg1: memref<256x128xf32, #tpu.memory_space<vmem>>, %arg2: memref<1x128xf32, #tpu.memory_space<vmem>>, %arg3: memref<128x128xf32, #tpu.memory_space<vmem>>, %arg4: memref<1x128xf32, #tpu.memory_space<vmem>>, %arg5: memref<2x128xf32, #tpu.memory_space<vmem>>) attributes {dimension_semantics = [], scalar_prefetch = 0 : i64, scratch_operands = 0 : i64, tpu.core_type = #tpu.core_type<tc>} {
    %c0 = arith.constant 0 : index
    %c0_0 = arith.constant 0 : index
    %0 = vector.load %arg0[%c0, %c0_0] : memref<2x256xf32, #tpu.memory_space<vmem>>, vector<2x256xf32>
    %c0_1 = arith.constant 0 : index
    %c0_2 = arith.constant 0 : index
    %1 = vector.load %arg1[%c0_1, %c0_2] : memref<256x128xf32, #tpu.memory_space<vmem>>, vector<256x128xf32>
    %cst = arith.constant dense<0.000000e+00> : vector<2x128xf32>
    %2 = tpu.matmul %0, %1, %cst {dimension_numbers = #tpu.dot_dimension_numbers<[1], [0], [0], [1], [0, 0, 1, 1], [], []>} : vector<2x256xf32>, vector<256x128xf32>, vector<2x128xf32> -> vector<2x128xf32>
    %c0_3 = arith.constant 0 : index
    %c0_4 = arith.constant 0 : index
    %3 = vector.load %arg2[%c0_3, %c0_4] : memref<1x128xf32, #tpu.memory_space<vmem>>, vector<1x128xf32>
    %4 = vector.broadcast %3 : vector<1x128xf32> to vector<2x128xf32>
    %5 = arith.addf %2, %4 : vector<2x128xf32>
    %cst_5 = arith.constant 0.000000e+00 : f32
    %6 = vector.broadcast %cst_5 : f32 to vector<2x128xf32>
    %7 = arith.maximumf %5, %6 : vector<2x128xf32>
    %c0_6 = arith.constant 0 : index
    %c0_7 = arith.constant 0 : index
    %8 = vector.load %arg3[%c0_6, %c0_7] : memref<128x128xf32, #tpu.memory_space<vmem>>, vector<128x128xf32>
    %cst_8 = arith.constant dense<0.000000e+00> : vector<2x128xf32>
    %9 = tpu.matmul %7, %8, %cst_8 {dimension_numbers = #tpu.dot_dimension_numbers<[1], [0], [0], [1], [0, 0, 1, 1], [], []>} : vector<2x128xf32>, vector<128x128xf32>, vector<2x128xf32> -> vector<2x128xf32>
    %c0_9 = arith.constant 0 : index
    %c0_10 = arith.constant 0 : index
    %10 = vector.load %arg4[%c0_9, %c0_10] : memref<1x128xf32, #tpu.memory_space<vmem>>, vector<1x128xf32>
    %11 = vector.broadcast %10 : vector<1x128xf32> to vector<2x128xf32>
    %12 = arith.addf %9, %11 : vector<2x128xf32>
    %13 = tpu.iota {dimensions = array<i32: 1>} : vector<2x128xi32>
    %c10_i32 = arith.constant 10 : i32
    %14 = vector.broadcast %c10_i32 : i32 to vector<2x128xi32>
    %15 = arith.cmpi slt, %13, %14 : vector<2x128xi32>
    %cst_11 = arith.constant -1.000000e+30 : f32
    %16 = vector.broadcast %cst_11 : f32 to vector<2x128xf32>
    %17 = arith.select %15, %12, %16 : vector<2x128xi1>, vector<2x128xf32>
    %cst_12 = arith.constant dense<0xFF800000> : vector<2xf32>
    %18 = vector.multi_reduction <maximumf>, %17, %cst_12 [1] : vector<2x128xf32> to vector<2xf32>
    %19 = vector.shape_cast %18 : vector<2xf32> to vector<2x1xf32>
    %20 = vector.broadcast %19 : vector<2x1xf32> to vector<2x128xf32>
    %21 = arith.subf %17, %20 : vector<2x128xf32>
    %22 = math.exp %21 : vector<2x128xf32>
    %cst_13 = arith.constant dense<0.000000e+00> : vector<2xf32>
    %23 = vector.multi_reduction <add>, %22, %cst_13 [1] : vector<2x128xf32> to vector<2xf32>
    %24 = vector.shape_cast %23 : vector<2xf32> to vector<2x1xf32>
    %25 = vector.broadcast %24 : vector<2x1xf32> to vector<2x128xf32>
    %26 = arith.divf %22, %25 : vector<2x128xf32>
    %c0_14 = arith.constant 0 : index
    %c0_15 = arith.constant 0 : index
    %27 = vector.load %arg5[%c0_14, %c0_15] : memref<2x128xf32, #tpu.memory_space<vmem>>, vector<2x128xf32>
    tpu.vector_store %arg5[%c0_14, %c0_15], %26 {strides = array<i32>} : memref<2x128xf32, #tpu.memory_space<vmem>>, vector<2x128xf32>,
    return
  }
}

</mosaic_0001>

<llo_original>
// kernel: testnet_forward.1
$region0: #{testnet_forward.1}
  #allocation0 [shape = 'u32[]', space=smem, size = 0x4, offset = 0x4, fixed_abs, tag = 'smem constant byte address 0x4 - core index']
  #allocation1 [shape = 'u32[144,128]{1,0:T(1,128)}', space=vmem, size = 0x12000, scoped, tag = 'internal scratch']
  %s0 = inlined_call_operand.vmem [shape: f32[2,256], index: 0, kind: input, shape index: {}]
  %s1 = inlined_call_operand.hbm [shape: f32[256,128], index: 1, kind: input, shape index: {}]
  %s2 = inlined_call_operand.vmem [shape: f32[1,128], index: 2, kind: input, shape index: {}]
  %s3 = inlined_call_operand.hbm [shape: f32[128,128], index: 3, kind: input, shape index: {}]
  %s4 = inlined_call_operand.vmem [shape: f32[1,128], index: 4, kind: input, shape index: {}]
  %s5 = inlined_call_operand.hbm [shape: f32[2,128], index: 5, kind: output, shape index: {}]
  %s6 = sld [smem:[#allocation0]]
  $region38: #{testnet_forward.1} parent=0
    _
  %s8 = ssub.s32 1, %s6
  %s9 = scalar_select 0, %s8, %s6
  $region1: #{testnet_forward.1} parent=0
    #allocation2 [shape = 'u8[131072]{0}', space=vmem, size = 0x20000, scoped, tag = 'input window, operand 1, single buffered']
    #allocation3 [shape = 's32[1]{0}', space=sflag, size = 0x4, scoped, tag = 'scoped memory for testnet_forward.1']
    #allocation4 [shape = 's32[1]{0}', space=sflag, size = 0x4, scoped, tag = 'scoped memory for testnet_forward.1']
    #allocation5 [shape = 'u8[65536]{0}', space=vmem, size = 0x10000, scoped, tag = 'input window, operand 3, single buffered']
    #allocation6 [shape = 's32[1]{0}', space=sflag, size = 0x4, scoped, tag = 'scoped memory for testnet_forward.1']
    #allocation7 [shape = 'u8[1024]{0}', space=vmem, size = 0x400, scoped, tag = 'output window, operand 0, single buffered']
    %10 = vsyncpa [#allocation3], 0
    %11 = vsyncpa [#allocation6], 0
    %12 = vsyncpa [#allocation4], 0
    // Predicated region
    $region2: #{testnet_forward.1} parent=1 // pred_check
      _
    $region3: #{testnet_forward.1} parent=1 // pred_check_branch
      %14 = sbr.rel (0) target = $region5
    $region4: #{testnet_forward.1} parent=1 // pred_region
      _
    $region5: #{testnet_forward.1} parent=1 // pred_fallthru
      _
    // Predicated region
    $region6: #{testnet_forward.1} parent=1 // pred_check
      _
    $region7: #{testnet_forward.1} parent=1 // pred_check_branch
      %16 = sbr.rel (0) target = $region9
    $region8: #{testnet_forward.1} parent=1 // pred_region
      %s18 = ssub.s32 4096, 4096
      %19 = vsyncadd [#allocation3], %s18
      %s20 = sshll.u32 [#allocation2], 4
      %s21 = int_to_ptr.vmem [resolvable:$true] %s20
      %26 = dma.hbm_to_vmem [thread:$0]  %s1, 4096, %s21, [#allocation3], 128, 128, 8
    $region9: #{testnet_forward.1} parent=1 // pred_fallthru
      _
    // Predicated region
    $region10: #{testnet_forward.1} parent=1 // pred_check
      _
    $region11: #{testnet_forward.1} parent=1 // pred_check_branch
      %28 = sbr.rel (0) target = $region13
    $region12: #{testnet_forward.1} parent=1 // pred_region
      _
    $region13: #{testnet_forward.1} parent=1 // pred_fallthru
      _
    // Predicated region
    $region14: #{testnet_forward.1} parent=1 // pred_check
      _
    $region15: #{testnet_forward.1} parent=1 // pred_check_branch
      %30 = sbr.rel (0) target = $region17
    $region16: #{testnet_forward.1} parent=1 // pred_region
      %s32 = ssub.s32 2048, 2048
      %33 = vsyncadd [#allocation6], %s32
      %s34 = sshll.u32 [#allocation5], 4
      %s35 = int_to_ptr.vmem [resolvable:$true] %s34
      %40 = dma.hbm_to_vmem [thread:$0]  %s3, 2048, %s35, [#allocation6], 128, 128, 8
    $region17: #{testnet_forward.1} parent=1 // pred_fallthru
      _
    // Predicated region
    $region18: #{testnet_forward.1} parent=1 // pred_check
      _
    $region19: #{testnet_forward.1} parent=1 // pred_check_branch
      %42 = sbr.rel (0) target = $region21
    $region20: #{testnet_forward.1} parent=1 // pred_region
      _
    $region21: #{testnet_forward.1} parent=1 // pred_fallthru
      _
    // Predicated region
    $region22: #{testnet_forward.1} parent=1 // pred_check
      _
    $region23: #{testnet_forward.1} parent=1 // pred_check_branch
      %44 = sbr.rel (0) target = $region25
    $region24: #{testnet_forward.1} parent=1 // pred_region
      %45 = dma.done [#allocation3], 4096
    $region25: #{testnet_forward.1} parent=1 // pred_fallthru
      _
    // Predicated region
    $region26: #{testnet_forward.1} parent=1 // pred_check
      _
    $region27: #{testnet_forward.1} parent=1 // pred_check_branch
      %47 = sbr.rel (0) target = $region29
    $region28: #{testnet_forward.1} parent=1 // pred_region
      %48 = dma.done [#allocation6], 2048
    $region29: #{testnet_forward.1} parent=1 // pred_fallthru
      _
    %v49 = vld [vmem:[%s0] sm:$0xf]
    %v50 = vld [vmem:[#allocation2] sm:$0xff]
    %v51 = vld [vmem:[#allocation2 + $0x8] sm:$0xff]
    %v52 = vld [vmem:[#allocation2 + $0x10] sm:$0xff]
    %v53 = vld [vmem:[#allocation2 + $0x18] sm:$0xff]
    %v54 = vld [vmem:[#allocation2 + $0x20] sm:$0xff]
    %v55 = vld [vmem:[#allocation2 + $0x28] sm:$0xff]
    %v56 = vld [vmem:[#allocation2 + $0x30] sm:$0xff]
    %v57 = vld [vmem:[#allocation2 + $0x38] sm:$0xff]
    %v58 = vld [vmem:[#allocation2 + $0x40] sm:$0xff]
    %v59 = vld [vmem:[#allocation2 + $0x48] sm:$0xff]
    %v60 = vld [vmem:[#allocation2 + $0x50] sm:$0xff]
    %v61 = vld [vmem:[#allocation2 + $0x58] sm:$0xff]
    %v62 = vld [vmem:[#allocation2 + $0x60] sm:$0xff]
    %v63 = vld [vmem:[#allocation2 + $0x68] sm:$0xff]
    %v64 = vld [vmem:[#allocation2 + $0x70] sm:$0xff]
    %v65 = vld [vmem:[#allocation2 + $0x78] sm:$0xff]
    %v66 = vld [vmem:[#allocation2 + $0x80] sm:$0xff]
    %v67 = vld [vmem:[#allocation2 + $0x88] sm:$0xff]
    %v68 = vld [vmem:[#allocation2 + $0x90] sm:$0xff]
    %v69 = vld [vmem:[#allocation2 + $0x98] sm:$0xff]
    %v70 = vld [vmem:[#allocation2 + $0xa0] sm:$0xff]
    %v71 = vld [vmem:[#allocation2 + $0xa8] sm:$0xff]
    %v72 = vld [vmem:[#allocation2 + $0xb0] sm:$0xff]
    %v73 = vld [vmem:[#allocation2 + $0xb8] sm:$0xff]
    %v74 = vld [vmem:[#allocation2 + $0xc0] sm:$0xff]
    %v75 = vld [vmem:[#allocation2 + $0xc8] sm:$0xff]
    %v76 = vld [vmem:[#allocation2 + $0xd0] sm:$0xff]
    %v77 = vld [vmem:[#allocation2 + $0xd8] sm:$0xff]
    %v78 = vld [vmem:[#allocation2 + $0xe0] sm:$0xff]
    %v79 = vld [vmem:[#allocation2 + $0xe8] sm:$0xff]
    %v80 = vld [vmem:[#allocation2 + $0xf0] sm:$0xff]
    %v81 = vld [vmem:[#allocation2 + $0xf8] sm:$0xff]
    %v82 = vld [vmem:[%s2] sm:$0x1]
    %v84 = vlaneseq
    %v85 = vshrl.u32 %v84, 7
    %v86 = vsub.s32 0, %v85
    %v87 = vrot.slane %v82, %v86
    %v91 = vunpack.c.l.s4 1983009808
    %v92 = vunpack.c.0.s8 %v91
    %v93 = vlaneseq
    %v94 = vshrl.u32 %v93, 7
    %v95 = vsub.s32 %v92, %v94
    %v96 = vrot.slane %v49, %v95
    %v97 = vcombine.high %v96, %v96
    %100 = vmatprep.subr.mxu0 0.0
    %101 = vmatpush1.msra.mxu0 %v50
    %102 = vmatprep.subr.mxu0 0.0
    %103 = vmatpush1.msra.mxu0 %v51
    %104 = vmatprep.subr.mxu0 0.0
    %105 = vmatpush1.msra.mxu0 %v52
    %106 = vmatprep.subr.mxu0 0.0
    %107 = vmatpush1.msra.mxu0 %v53
    %108 = vmatprep.subr.mxu0 0.0
    %109 = vmatpush1.msra.mxu0 %v54
    %110 = vmatprep.subr.mxu0 0.0
    %111 = vmatpush1.msra.mxu0 %v55
    %112 = vmatprep.subr.mxu0 0.0
    %113 = vmatpush1.msra.mxu0 %v56
    %114 = vmatprep.subr.mxu0 0.0
    %115 = vmatpush1.msra.mxu0 %v57
    %116 = vmatprep.subr.mxu0 0.0
    %117 = vmatpush1.msra.mxu0 %v58
    %118 = vmatprep.subr.mxu0 0.0
    %119 = vmatpush1.msra.mxu0 %v59
    %120 = vmatprep.subr.mxu0 0.0
    %121 = vmatpush1.msra.mxu0 %v60
    %122 = vmatprep.subr.mxu0 0.0
    %123 = vmatpush1.msra.mxu0 %v61
    %124 = vmatprep.subr.mxu0 0.0
    %125 = vmatpush1.msra.mxu0 %v62
    %126 = vmatprep.subr.mxu0 0.0
    %127 = vmatpush1.msra.mxu0 %v63
    %128 = vmatprep.subr.mxu0 0.0
    %129 = vmatpush1.msra.mxu0 %v64
    %130 = vmatprep.subr.mxu0 0.0
    %131 = vmatpush1.msra.mxu0 %v65
    %132 = vmatprep.subr.mxu0 0.0
    %133 = vmatpush1.msra.mxu0 %v66
    %134 = vmatprep.subr.mxu0 0.0
    %135 = vmatpush1.msra.mxu0 %v67
    %136 = vmatprep.subr.mxu0 0.0
    %137 = vmatpush1.msra.mxu0 %v68
    %138 = vmatprep.subr.mxu0 0.0
    %139 = vmatpush1.msra.mxu0 %v69
    %140 = vmatprep.subr.mxu0 0.0
    %141 = vmatpush1.msra.mxu0 %v70
    %142 = vmatprep.subr.mxu0 0.0
    %143 = vmatpush1.msra.mxu0 %v71
    %144 = vmatprep.subr.mxu0 0.0
    %145 = vmatpush1.msra.mxu0 %v72
    %146 = vmatprep.subr.mxu0 0.0
    %147 = vmatpush1.msra.mxu0 %v73
    %148 = vmatprep.subr.mxu0 0.0
    %149 = vmatpush1.msra.mxu0 %v74
    %150 = vmatprep.subr.mxu0 0.0
    %151 = vmatpush1.msra.mxu0 %v75
    %152 = vmatprep.subr.mxu0 0.0
    %153 = vmatpush1.msra.mxu0 %v76
    %154 = vmatprep.subr.mxu0 0.0
    %155 = vmatpush1.msra.mxu0 %v77
    %156 = vmatprep.subr.mxu0 0.0
    %157 = vmatpush1.msra.mxu0 %v78
    %158 = vmatprep.subr.mxu0 0.0
    %159 = vmatpush1.msra.mxu0 %v79
    %160 = vmatprep.subr.mxu0 0.0
    %161 = vmatpush1.msra.mxu0 %v80
    %162 = vmatprep.subr.mxu0 0.0
    %163 = vmatpush1.msra.mxu0 %v81
    %164 = vmatprep.mubr.f32.mxu0 %v97
    %165 = vmatmul.mubr.f32.gmra.mrb[0].mxu0 %v96
    %v166 = vpop.f32.mrb[0].mxu0
    %v167 = vadd.f32 %v87, %v166
    %v168 = vpop.f32.mrb[0].mxu0
    %169 = vdwg.mxu0
    %v170 = vmax.f32 %v167, 0.0
    %v171 = vld [vmem:[#allocation5] sm:$0xff]
    %v172 = vld [vmem:[#allocation5 + $0x8] sm:$0xff]
    %v173 = vld [vmem:[#allocation5 + $0x10] sm:$0xff]
    %v174 = vld [vmem:[#allocation5 + $0x18] sm:$0xff]
    %v175 = vld [vmem:[#allocation5 + $0x20] sm:$0xff]
    %v176 = vld [vmem:[#allocation5 + $0x28] sm:$0xff]
    %v177 = vld [vmem:[#allocation5 + $0x30] sm:$0xff]
    %v178 = vld [vmem:[#allocation5 + $0x38] sm:$0xff]
    %v179 = vld [vmem:[#allocation5 + $0x40] sm:$0xff]
    %v180 = vld [vmem:[#allocation5 + $0x48] sm:$0xff]
    %v181 = vld [vmem:[#allocation5 + $0x50] sm:$0xff]
    %v182 = vld [vmem:[#allocation5 + $0x58] sm:$0xff]
    %v183 = vld [vmem:[#allocation5 + $0x60] sm:$0xff]
    %v184 = vld [vmem:[#allocation5 + $0x68] sm:$0xff]
    %v185 = vld [vmem:[#allocation5 + $0x70] sm:$0xff]
    %v186 = vld [vmem:[#allocation5 + $0x78] sm:$0xff]
    %v187 = vld [vmem:[%s4] sm:$0x1]
    %v189 = vlaneseq
    %v190 = vshrl.u32 %v189, 7
    %v191 = vsub.s32 0, %v190
    %v192 = vrot.slane %v187, %v191
    %194 = vmatprep.subr.mxu0 0.0
    %195 = vmatpush1.msra.mxu0 %v171
    %196 = vmatprep.subr.mxu0 0.0
    %197 = vmatpush1.msra.mxu0 %v172
    %198 = vmatprep.subr.mxu0 0.0
    %199 = vmatpush1.msra.mxu0 %v173
    %200 = vmatprep.subr.mxu0 0.0
    %201 = vmatpush1.msra.mxu0 %v174
    %202 = vmatprep.subr.mxu0 0.0
    %203 = vmatpush1.msra.mxu0 %v175
    %204 = vmatprep.subr.mxu0 0.0
    %205 = vmatpush1.msra.mxu0 %v176
    %206 = vmatprep.subr.mxu0 0.0
    %207 = vmatpush1.msra.mxu0 %v177
    %208 = vmatprep.subr.mxu0 0.0
    %209 = vmatpush1.msra.mxu0 %v178
    %210 = vmatprep.subr.mxu0 0.0
    %211 = vmatpush1.msra.mxu0 %v179
    %212 = vmatprep.subr.mxu0 0.0
    %213 = vmatpush1.msra.mxu0 %v180
    %214 = vmatprep.subr.mxu0 0.0
    %215 = vmatpush1.msra.mxu0 %v181
    %216 = vmatprep.subr.mxu0 0.0
    %217 = vmatpush1.msra.mxu0 %v182
    %218 = vmatprep.subr.mxu0 0.0
    %219 = vmatpush1.msra.mxu0 %v183
    %220 = vmatprep.subr.mxu0 0.0
    %221 = vmatpush1.msra.mxu0 %v184
    %222 = vmatprep.subr.mxu0 0.0
    %223 = vmatpush1.msra.mxu0 %v185
    %224 = vmatprep.subr.mxu0 0.0
    %225 = vmatpush1.msra.mxu0 %v186
    %226 = vmatprep.subr.mxu0 0.0
    %227 = vmatpush1.msra.mxu0 0.0
    %228 = vmatprep.subr.mxu0 0.0
    %229 = vmatpush1.msra.mxu0 0.0
    %230 = vmatprep.subr.mxu0 0.0
    %231 = vmatpush1.msra.mxu0 0.0
    %232 = vmatprep.subr.mxu0 0.0
    %233 = vmatpush1.msra.mxu0 0.0
    %234 = vmatprep.subr.mxu0 0.0
    %235 = vmatpush1.msra.mxu0 0.0
    %236 = vmatprep.subr.mxu0 0.0
    %237 = vmatpush1.msra.mxu0 0.0
    %238 = vmatprep.subr.mxu0 0.0
    %239 = vmatpush1.msra.mxu0 0.0
    %240 = vmatprep.subr.mxu0 0.0
    %241 = vmatpush1.msra.mxu0 0.0
    %242 = vmatprep.subr.mxu0 0.0
    %243 = vmatpush1.msra.mxu0 0.0
    %244 = vmatprep.subr.mxu0 0.0
    %245 = vmatpush1.msra.mxu0 0.0
    %246 = vmatprep.subr.mxu0 0.0
    %247 = vmatpush1.msra.mxu0 0.0
    %248 = vmatprep.subr.mxu0 0.0
    %249 = vmatpush1.msra.mxu0 0.0
    %250 = vmatprep.subr.mxu0 0.0
    %251 = vmatpush1.msra.mxu0 0.0
    %252 = vmatprep.subr.mxu0 0.0
    %253 = vmatpush1.msra.mxu0 0.0
    %254 = vmatprep.subr.mxu0 0.0
    %255 = vmatpush1.msra.mxu0 0.0
    %256 = vmatprep.subr.mxu0 0.0
    %257 = vmatpush1.msra.mxu0 0.0
    %258 = vmatprep.mubr.f32.mxu0 0.0
    %259 = vmatmul.mubr.f32.gmra.mrb[0].mxu0 %v170
    %v260 = vpop.f32.mrb[0].mxu0
    %v261 = vadd.f32 %v192, %v260
    %v262 = vpop.f32.mrb[0].mxu0
    %263 = vdwg.mxu0
    %v264 = vlaneseq
    %v265 = vand.u32 %v264, 127
    %vm266 = vcmp.lt.s32.totalorder %v265, 10
    %v267 = vsel %vm266, %v261, -1e+30
    %vm268 = vcmask 1041408
    %v269 = vsel %vm268, %v267, -inf
    %270 = vmax.xlane.f32.xlu0 %v269
    %v271 = vpop.xlane.xlu0 %270
    %v272 = vsub.f32 %v267, %v271
    %v273 = vmul.f32 %v272, 1.442695
    %v274 = vpow.pop %v273
    %v275 = vsel %vm268, %v274, 0.0
    %276 = vadd.xlane.f32.xlu0 %v275
    %v277 = vpop.xlane.xlu0 %276
    %v278 = vrcp.pop %v277
    %v279 = vmul.f32 %v274, %v278
    %280 = vst [vmem:[#allocation7] sm:$0x3] %v279
    // Predicated region
    $region30: #{testnet_forward.1} parent=1 // pred_check
      _
    $region31: #{testnet_forward.1} parent=1 // pred_check_branch
      %282 = sbr.rel (0) target = $region33
    $region32: #{testnet_forward.1} parent=1 // pred_region
      %s284 = ssub.s32 32, 32
      %285 = vsyncadd [#allocation4], %s284
      %s287 = sshll.u32 [#allocation7], 4
      %s288 = int_to_ptr.vmem [resolvable:$true] %s287
      %290 = dma.vmem_to_hbm [thread:$0]  %s288, 32, %s5, [#allocation4]
    $region33: #{testnet_forward.1} parent=1 // pred_fallthru
      _
    // Predicated region
    $region34: #{testnet_forward.1} parent=1 // pred_check
      _
    $region35: #{testnet_forward.1} parent=1 // pred_check_branch
      %292 = sbr.rel (0) target = $region37
    $region36: #{testnet_forward.1} parent=1 // pred_region
      %293 = dma.done [#allocation4], 32
    $region37: #{testnet_forward.1} parent=1 // pred_fallthru
      _
    %294 = vsyncpa [#allocation3], 1
    %295 = vsyncpa [#allocation6], 1
    %296 = vsyncpa [#allocation4], 1

</llo_original>
